<compile_context>
chip_gen: v6e
topology: v6e:2x2x1
jax: 0.10.0
libtpu: 0.0.40
codegen_flags: <defaults>
</compile_context>

<pallas_src>
import functools

import jax
import jax.numpy as jnp
from jax.experimental import pallas as pl
from jax.experimental.pallas import tpu as pltpu

_LANE = 128


def _kd_block_kernel(pred_ref, soft_ref, out_ref, *, inv_t, sb_valid, tb, ragged):
    """One (C, tb, 128) logits tile -> one scalar partial KL sum.

    pred_ref, soft_ref : (C, tb, 128)  student / teacher logits tile
    out_ref            : (1, 1)        f32 partial sum for this grid point
    """
    p = pred_ref[...].astype(jnp.float32) * inv_t        # student logits / T
    s = soft_ref[...].astype(jnp.float32) * inv_t        # teacher logits / T

    # log_softmax(pred/T) over the channel (leading) axis -- numerically stable.
    p_shift = p - jnp.max(p, axis=0, keepdims=True)
    log_qden = jnp.log(jnp.sum(jnp.exp(p_shift), axis=0, keepdims=True))

    # softmax(soft/T) over the channel axis.
    s_shift = s - jnp.max(s, axis=0, keepdims=True)
    s_exp = jnp.exp(s_shift)
    s_den = jnp.sum(s_exp, axis=0, keepdims=True)        # >= 1, never 0
    log_sden = jnp.log(s_den)

    # KL pointwise term summed over channels, with the per-pixel constant
    #   k = log_qden - log_sden            (shape (1, tb, 128))
    # folded in once (saves one full C-sized broadcast subtract):
    #   sum_c softmax_c * (log_softmax_c - log_q_c)
    #     = (1/s_den) * sum_c s_exp_c * ((s_shift_c - p_shift_c) + k)
    # s_exp underflow yields an exact-0 contribution, matching torch's
    # xlogy(0, .) == 0 convention -- no explicit `tgt > 0` mask needed.
    k = log_qden - log_sden
    diff = (s_shift - p_shift) + k
    inner = jnp.sum(s_exp * diff, axis=0)                 # (tb, 128)
    partial = inner * pl.reciprocal(s_den[0], approx=False)

    if ragged:
        # Compile-time branch: Sb % tb != 0, so only the LAST spatial block
        # reads undefined rows past sb_valid.  Mask there only; every other
        # grid step takes the unmasked fast path.
        sb = pl.program_id(1)
        last = pl.num_programs(1) - 1

        @pl.when(sb != last)
        def _():
            out_ref[...] = jnp.sum(partial, keepdims=True)

        @pl.when(sb == last)
        def _():
            row = jax.lax.broadcasted_iota(jnp.int32, partial.shape, 0) + sb * tb
            out_ref[...] = jnp.sum(
                jnp.where(row < sb_valid, partial, 0.0), keepdims=True)
    else:
        out_ref[...] = jnp.sum(partial, keepdims=True)


def _sublane_multiple(dtype):
    return 8 if jnp.dtype(dtype).itemsize >= 4 else 16


def _align_block_rows(desired, sb_total, sub):
    """Sublane-aligned number of 128-lane rows per input block."""
    desired = int(desired)
    if desired >= sb_total or sb_total <= sub:
        return sb_total                       # full dim is always layout-legal
    return max(sub, (desired // sub) * sub)


def _vmem_limit_bytes():
    # Generation-aware scoped-VMEM limit: ~48 MiB on 128-MiB parts (v5e/v6e),
    # ~40 MiB on v7x (64 MiB physical per TensorCore), leaving headroom for
    # Mosaic internal scratch and the f32 element-wise temporaries.
    try:
        cap = pltpu.get_tpu_info().vmem_capacity_bytes
    except Exception:
        cap = 64 * 1024 * 1024                # assume the smallest (v7x) part
    return int(min(48 * 1024 * 1024, max(32 * 1024 * 1024, cap - 24 * 1024 * 1024)))


def criterion_kd(pred, soft, temperature=10.0, *, block_rows=None,
                 block_bytes=2 * 1024 * 1024):
    """pred, soft: (N, C, H, W) logits (NCHW, f32 or bf16). Returns scalar loss."""
    assert pred.shape == soft.shape and pred.ndim == 4
    N, C, H, W = pred.shape
    total_elems = N * C * H * W
    S = H * W

    # Lane-dense layout: flatten spatial onto a (rows, 128) plane so every
    # vreg has all 128 lanes occupied regardless of W and the channel softmax
    # stays a cheap leading-axis reduce.  For contiguous NCHW with
    # S % 128 == 0 this reshape is a free view (no HBM copy).
    if S % _LANE != 0:
        # Ragged spatial tail: zero-pad the flattened spatial axis.  A padded
        # column has identical pred/soft logits across channels, so its KL
        # contribution is exactly 0 (we still divide by the ORIGINAL numel).
        # TODO(synk): this fallback costs one extra HBM copy of each input;
        # only taken when H*W is not a multiple of 128.
        s_pad = ((S + _LANE - 1) // _LANE) * _LANE
        pred = jnp.pad(pred.reshape(N, C, S), ((0, 0), (0, 0), (0, s_pad - S)))
        soft = jnp.pad(soft.reshape(N, C, S), ((0, 0), (0, 0), (0, s_pad - S)))
        S = s_pad
    Sb = S // _LANE
    pred4 = pred.reshape(N, C, Sb, _LANE)
    soft4 = soft.reshape(N, C, Sb, _LANE)

    # Block sizing: per-input blocks near the ~1-2 MiB HBM-roofline plateau,
    # budgeted on the f32 working set (the kernel upcasts internally); the
    # (sublane, 128) layout is dense by construction so no hidden padding.
    sub = _sublane_multiple(pred4.dtype)
    if block_rows is None:
        block_rows = max(1, block_bytes // (C * _LANE * 4))
    tb = _align_block_rows(block_rows, Sb, sub)
    nb = pl.cdiv(Sb, tb)
    ragged = (Sb % tb) != 0

    kernel = functools.partial(
        _kd_block_kernel, inv_t=1.0 / float(temperature),
        sb_valid=Sb, tb=tb, ragged=ragged)

    partials = pl.pallas_call(
        kernel,
        out_shape=jax.ShapeDtypeStruct((N, nb, 1, 1), jnp.float32),
        grid_spec=pltpu.PrefetchScalarGridSpec(
            num_scalar_prefetch=0,
            grid=(N, nb),
            in_specs=[
                pl.BlockSpec((None, C, tb, _LANE), lambda n, sb: (n, 0, sb, 0)),
                pl.BlockSpec((None, C, tb, _LANE), lambda n, sb: (n, 0, sb, 0)),
            ],
            out_specs=pl.BlockSpec((None, None, 1, 1),
                                   lambda n, sb: (n, sb, 0, 0)),
        ),
        compiler_params=pltpu.CompilerParams(
            # Every grid point writes its own partial, so both axes are
            # parallel: on v7x the two TensorCores split N x nb of work even
            # when N == 1; on v5e/v6e (single TC) this is neutral.
            dimension_semantics=("parallel", "parallel"),
            vmem_limit_bytes=_vmem_limit_bytes(),
        ),
    )(pred4, soft4)

    scale = (float(temperature) ** 2) / float(total_elems)
    return jnp.sum(partials) * scale


def _reference_kd(pred, soft, temperature=10.0):
    # pure-JAX reference matching torch.nn.KLDivLoss(reduction='mean') * T^2
    p = pred.astype(jnp.float32) / temperature
    s = soft.astype(jnp.float32) / temperature
    log_q = jax.nn.log_softmax(p, axis=1)
    tgt = jax.nn.softmax(s, axis=1)
    log_tgt = jax.nn.log_softmax(s, axis=1)
    pointwise = jnp.where(tgt > 0, tgt * (log_tgt - log_q), 0.0)
    return jnp.mean(pointwise) * temperature ** 2


if __name__ == "__main__":
    key = jax.random.PRNGKey(0)
    k1, k2, k3, k4, k5, k6 = jax.random.split(key, 6)

    # Primary shape: batch=2, channels=4, spatial=16x16 (NCHW, f32).
    pred = jax.random.normal(k1, (2, 4, 16, 16), dtype=jnp.float32) * 3.0
    soft = jax.random.normal(k2, (2, 4, 16, 16), dtype=jnp.float32) * 3.0
    loss = jax.block_until_ready(criterion_kd(pred, soft, temperature=10.0))
    ref = _reference_kd(pred, soft, temperature=10.0)
    assert jnp.allclose(loss, ref, rtol=1e-5, atol=1e-6), (loss, ref)

    # Ragged spatial-block path: Sb = 48*32/128 = 12 rows, block_rows=8 ->
    # 2 blocks, only the last one takes the masked pl.when path.
    pred2 = jax.random.normal(k3, (2, 4, 48, 32), dtype=jnp.float32) * 3.0
    soft2 = jax.random.normal(k4, (2, 4, 48, 32), dtype=jnp.float32) * 3.0
    loss2 = jax.block_until_ready(
        criterion_kd(pred2, soft2, temperature=10.0, block_rows=8))
    ref2 = _reference_kd(pred2, soft2, temperature=10.0)
    assert jnp.allclose(loss2, ref2, rtol=1e-5, atol=1e-6), (loss2, ref2)

    # bf16 inputs consumed as-is (kernel upcasts to f32 internally).
    pred3 = (jax.random.normal(k5, (2, 4, 16, 16), dtype=jnp.float32) * 3.0
             ).astype(jnp.bfloat16)
    soft3 = (jax.random.normal(k6, (2, 4, 16, 16), dtype=jnp.float32) * 3.0
             ).astype(jnp.bfloat16)
    loss3 = jax.block_until_ready(criterion_kd(pred3, soft3, temperature=10.0))
    ref3 = _reference_kd(pred3, soft3, temperature=10.0)
    assert jnp.allclose(loss3, ref3, rtol=1e-4, atol=1e-5), (loss3, ref3)

    # H*W not a multiple of 128 and N=1: exercises the zero-pad fallback and
    # the fully parallel (1 x nb) grid.
    pred4_ = jax.random.normal(k1, (1, 4, 10, 10), dtype=jnp.float32) * 3.0
    soft4_ = jax.random.normal(k2, (1, 4, 10, 10), dtype=jnp.float32) * 3.0
    loss4 = jax.block_until_ready(criterion_kd(pred4_, soft4_, temperature=10.0))
    ref4 = _reference_kd(pred4_, soft4_, temperature=10.0)
    assert jnp.allclose(loss4, ref4, rtol=1e-5, atol=1e-6), (loss4, ref4)

    print("KERNEL_OK")
</pallas_src>

<mosaic_0001>
module attributes {stable_mosaic.version = 11 : i64} {
  func.func @_kd_block_kernel(%arg0: i32, %arg1: i32, %arg2: memref<1x4x2x128xf32, #tpu.memory_space<vmem>>, %arg3: memref<1x4x2x128xf32, #tpu.memory_space<vmem>>, %arg4: memref<1x1x1x1xf32, #tpu.memory_space<vmem>>) attributes {dimension_semantics = [#tpu.dimension_semantics<parallel>, #tpu.dimension_semantics<parallel>], iteration_bounds = array<i64: 2, 1>, scalar_prefetch = 0 : i64, scratch_operands = 0 : i64, tpu.core_type = #tpu.core_type<tc>, window_params = [{transform_indices = @transform_0, window_bounds = array<i64: 1, 4, 2, 128>}, {transform_indices = @transform_1, window_bounds = array<i64: 1, 4, 2, 128>}, {transform_indices = @transform_2, window_bounds = array<i64: 1, 1, 1, 1>}]} {
    %c0 = arith.constant 0 : index
    %c0_0 = arith.constant 0 : index
    %c0_1 = arith.constant 0 : index
    %c0_2 = arith.constant 0 : index
    %0 = vector.load %arg2[%c0, %c0_0, %c0_1, %c0_2] : memref<1x4x2x128xf32, #tpu.memory_space<vmem>>, vector<1x4x2x128xf32>
    %1 = vector.shape_cast %0 : vector<1x4x2x128xf32> to vector<4x2x128xf32>
    %cst = arith.constant 1.000000e-01 : f32
    %2 = vector.broadcast %cst : f32 to vector<4x2x128xf32>
    %3 = arith.mulf %1, %2 : vector<4x2x128xf32>
    %c0_3 = arith.constant 0 : index
    %c0_4 = arith.constant 0 : index
    %c0_5 = arith.constant 0 : index
    %c0_6 = arith.constant 0 : index
    %4 = vector.load %arg3[%c0_3, %c0_4, %c0_5, %c0_6] : memref<1x4x2x128xf32, #tpu.memory_space<vmem>>, vector<1x4x2x128xf32>
    %5 = vector.shape_cast %4 : vector<1x4x2x128xf32> to vector<4x2x128xf32>
    %cst_7 = arith.constant 1.000000e-01 : f32
    %6 = vector.broadcast %cst_7 : f32 to vector<4x2x128xf32>
    %7 = arith.mulf %5, %6 : vector<4x2x128xf32>
    %cst_8 = arith.constant dense<0xFF800000> : vector<2x128xf32>
    %8 = vector.multi_reduction <maximumf>, %3, %cst_8 [0] : vector<4x2x128xf32> to vector<2x128xf32>
    %9 = vector.shape_cast %8 : vector<2x128xf32> to vector<1x2x128xf32>
    %10 = vector.broadcast %9 : vector<1x2x128xf32> to vector<4x2x128xf32>
    %11 = arith.subf %3, %10 : vector<4x2x128xf32>
    %12 = math.exp %11 : vector<4x2x128xf32>
    %cst_9 = arith.constant dense<0.000000e+00> : vector<2x128xf32>
    %13 = vector.multi_reduction <add>, %12, %cst_9 [0] : vector<4x2x128xf32> to vector<2x128xf32>
    %14 = vector.shape_cast %13 : vector<2x128xf32> to vector<1x2x128xf32>
    %15 = math.log %14 : vector<1x2x128xf32>
    %cst_10 = arith.constant dense<0xFF800000> : vector<2x128xf32>
    %16 = vector.multi_reduction <maximumf>, %7, %cst_10 [0] : vector<4x2x128xf32> to vector<2x128xf32>
    %17 = vector.shape_cast %16 : vector<2x128xf32> to vector<1x2x128xf32>
    %18 = vector.broadcast %17 : vector<1x2x128xf32> to vector<4x2x128xf32>
    %19 = arith.subf %7, %18 : vector<4x2x128xf32>
    %20 = math.exp %19 : vector<4x2x128xf32>
    %cst_11 = arith.constant dense<0.000000e+00> : vector<2x128xf32>
    %21 = vector.multi_reduction <add>, %20, %cst_11 [0] : vector<4x2x128xf32> to vector<2x128xf32>
    %22 = vector.shape_cast %21 : vector<2x128xf32> to vector<1x2x128xf32>
    %23 = math.log %22 : vector<1x2x128xf32>
    %24 = arith.subf %15, %23 : vector<1x2x128xf32>
    %25 = arith.subf %19, %11 : vector<4x2x128xf32>
    %26 = vector.broadcast %24 : vector<1x2x128xf32> to vector<4x2x128xf32>
    %27 = arith.addf %25, %26 : vector<4x2x128xf32>
    %28 = arith.mulf %20, %27 : vector<4x2x128xf32>
    %cst_12 = arith.constant dense<0.000000e+00> : vector<2x128xf32>
    %29 = vector.multi_reduction <add>, %28, %cst_12 [0] : vector<4x2x128xf32> to vector<2x128xf32>
    %30 = vector.shape_cast %22 : vector<1x2x128xf32> to vector<2x128xf32>
    %31 = tpu.reciprocal %30 : vector<2x128xf32> -> vector<2x128xf32>
    %32 = arith.mulf %29, %31 : vector<2x128xf32>
    %33 = vector.shape_cast %32 : vector<2x128xf32> to vector<1x2x128xf32>
    %cst_13 = arith.constant dense<0.000000e+00> : vector<1xf32>
    %34 = vector.multi_reduction <add>, %33, %cst_13 [1, 2] : vector<1x2x128xf32> to vector<1xf32>
    %35 = vector.shape_cast %34 : vector<1xf32> to vector<1x1x1xf32>
    %36 = vector.extract %35[0, 0, 0] : f32 from vector<1x1x1xf32>
    %37 = vector.broadcast %36 : f32 to vector<1x1xf32>
    %c0_14 = arith.constant 0 : index
    %c0_15 = arith.constant 0 : index
    %c0_16 = arith.constant 0 : index
    %c0_17 = arith.constant 0 : index
    %38 = vector.load %arg4[%c0_14, %c0_15, %c0_16, %c0_17] : memref<1x1x1x1xf32, #tpu.memory_space<vmem>>, vector<1x1x1x1xf32>
    %39 = vector.shape_cast %38 : vector<1x1x1x1xf32> to vector<1x1xf32>
    %40 = vector.shape_cast %37 : vector<1x1xf32> to vector<1x1x1x1xf32>
    tpu.vector_store %arg4[%c0_14, %c0_15, %c0_16, %c0_17], %40 {strides = array<i32>} : memref<1x1x1x1xf32, #tpu.memory_space<vmem>>, vector<1x1x1x1xf32>,
    return
  }
  func.func @transform_0(%arg0: i32, %arg1: i32) -> (i32, i32, i32, i32) {
    %c0_i32 = arith.constant 0 : i32
    %c0_i32_0 = arith.constant 0 : i32
    %c0_i32_1 = arith.constant 0 : i32
    return %arg0, %c0_i32, %arg1, %c0_i32_0 : i32, i32, i32, i32
  }
  func.func @transform_1(%arg0: i32, %arg1: i32) -> (i32, i32, i32, i32) {
    %c0_i32 = arith.constant 0 : i32
    %c0_i32_0 = arith.constant 0 : i32
    %c0_i32_1 = arith.constant 0 : i32
    return %arg0, %c0_i32, %arg1, %c0_i32_0 : i32, i32, i32, i32
  }
  func.func @transform_2(%arg0: i32, %arg1: i32) -> (i32, i32, i32, i32) {
    %c0_i32 = arith.constant 0 : i32
    %c0_i32_0 = arith.constant 0 : i32
    %c0_i32_1 = arith.constant 0 : i32
    return %arg0, %arg1, %c0_i32, %c0_i32_0 : i32, i32, i32, i32
  }
}

</mosaic_0001>

<llo_original>
// kernel: tpu_custom_call.1
$region0: #{tpu_custom_call.1}
  #allocation0 [shape = 'u32[]', space=smem, size = 0x4, offset = 0x4, fixed_abs, tag = 'smem constant byte address 0x4 - core index']
  #allocation1 [shape = 'u32[144,128]{1,0:T(1,128)}', space=vmem, size = 0x12000, scoped, tag = 'internal scratch']
  %s0 = inlined_call_operand.hbm [shape: f32[2,4,2,128], index: 0, kind: input, shape index: {}]
  %s1 = inlined_call_operand.hbm [shape: f32[2,4,2,128], index: 1, kind: input, shape index: {}]
  %s2 = inlined_call_operand.vmem [shape: f32[2,1,1,1], index: 2, kind: output, shape index: {}]
  %s3 = sld [smem:[#allocation0]]
  $region49: #{tpu_custom_call.1} parent=0
    _
  %s5 = ssub.s32 1, %s3
  %s6 = scalar_select 0, %s5, %s3
  $region1: #{tpu_custom_call.1} parent=0
    #allocation2 [shape = 'u8[8192]{0}', space=vmem, size = 0x2000, scoped, tag = 'input window, operand 0']
    #allocation3 [shape = 's32[2]{0}', space=sflag, size = 0x8, scoped, tag = 'scoped memory for tpu_custom_call.1']
    #allocation4 [shape = 'u8[8192]{0}', space=vmem, size = 0x2000, scoped, tag = 'input window, operand 1']
    #allocation5 [shape = 's32[2]{0}', space=sflag, size = 0x8, scoped, tag = 'scoped memory for tpu_custom_call.1']
    %7 = vsyncpa [#allocation3], 0
    %s8 = scalar_lea.sflag [#allocation3], 1
    %9 = vsyncpa %s8, 0
    %10 = vsyncpa [#allocation5], 0
    %s11 = scalar_lea.sflag [#allocation5], 1
    %12 = vsyncpa %s11, 0
    loop: start=0, step=1, limit=4
    $region2: #{tpu_custom_call.1} parent=1 // loop_pre_header
      _
    $region3: #{tpu_custom_call.1} parent=1 // loop_header
      %s14 = sphi 0, %s18
      %p15 = scmp.ge.s32.totalorder %s14, 4
      %s21 = sphi 0, %s33
      %s22 = sphi 0, %s29
      %s23 = sphi 0, %s21
      %s24 = sphi 0, %s22
      %s25 = sphi 0, %s23
      %s26 = sphi 0, %s24
      %s38 = sphi 0, %s40
      %s41 = sphi 0, %s38
      %s42 = sphi 0, %s41
      %s58 = sphi 0, %s42
      %s66 = sphi 0, %s68
      %s69 = sphi 0, %s66
      %s70 = sphi 0, %s69
      %s86 = sphi 0, %s70
      %s94 = sphi 0, %s96
      %s97 = sphi 0, %s94
      %s98 = sphi 0, %s97
      %s114 = sphi 0, %s98
    $region4: #{tpu_custom_call.1} parent=1 // loop_header_branch
      %17 = sbr.rel (%p15) target = $region8
    $region5: #{tpu_custom_call.1} parent=1 // loop_body
      %s19 = ssub.s32 %s14, 1
      %s20 = ssub.s32 %s14, 2
      %s27 = sadd.s32 1, %s22
      %p28 = scmp.ge.s32.totalorder %s27, 1
      %s29 = scalar_select %p28, 0, %s27
      %s30 = sadd.s32 1, %s21
      %s31 = scalar_select %p28, %s30, %s21
      %p32 = scmp.ge.s32.totalorder %s31, 2
      %s33 = scalar_select %p32, 0, %s31
      %s34 = ssub.s32 %s21, %s33
      %s35 = ssub.s32 %s22, %s29
      %s36 = sor.u32 %s34, %s35
      %p37 = scmp.eq.s32.totalorder %s36, 0
      %s39 = sadd.s32 %s38, 1
      %s40 = scalar_select %p37, %s38, %s39
      %p43 = pneg %p37
      %p44 = scmp.eq.s32.totalorder %s14, 1
      %p45 = por %p43, %p44
      %p46 = scmp.ne.s32.totalorder %s38, %s41
      %p47 = scmp.eq.s32.totalorder %s14, 0
      %p48 = por %p46, %p47
      %p49 = scmp.ne.s32.totalorder %s38, %s41
      %p50 = scmp.eq.s32.totalorder %s19, 1
      %p51 = por %p49, %p50
      %p52 = scmp.ne.s32.totalorder %s41, %s42
      %p53 = scmp.eq.s32.totalorder %s19, 0
      %p54 = por %p52, %p53
      %p55 = scmp.ne.s32.totalorder %s41, %s42
      %p56 = scmp.eq.s32.totalorder %s20, 1
      %p57 = por %p55, %p56
      %p59 = scmp.ne.s32.totalorder %s42, %s58
      %p60 = scmp.eq.s32.totalorder %s20, 0
      %p61 = por %p59, %p60
      %s62 = ssub.s32 %s21, %s33
      %s63 = ssub.s32 %s22, %s29
      %s64 = sor.u32 %s62, %s63
      %p65 = scmp.eq.s32.totalorder %s64, 0
      %s67 = sadd.s32 %s66, 1
      %s68 = scalar_select %p65, %s66, %s67
      %p71 = pneg %p65
      %p72 = scmp.eq.s32.totalorder %s14, 1
      %p73 = por %p71, %p72
      %p74 = scmp.ne.s32.totalorder %s66, %s69
      %p75 = scmp.eq.s32.totalorder %s14, 0
      %p76 = por %p74, %p75
      %p77 = scmp.ne.s32.totalorder %s66, %s69
      %p78 = scmp.eq.s32.totalorder %s19, 1
      %p79 = por %p77, %p78
      %p80 = scmp.ne.s32.totalorder %s69, %s70
      %p81 = scmp.eq.s32.totalorder %s19, 0
      %p82 = por %p80, %p81
      %p83 = scmp.ne.s32.totalorder %s69, %s70
      %p84 = scmp.eq.s32.totalorder %s20, 1
      %p85 = por %p83, %p84
      %p87 = scmp.ne.s32.totalorder %s70, %s86
      %p88 = scmp.eq.s32.totalorder %s20, 0
      %p89 = por %p87, %p88
      %s90 = ssub.s32 %s21, %s33
      %s91 = ssub.s32 %s22, %s29
      %s92 = sor.u32 %s90, %s91
      %p93 = scmp.eq.s32.totalorder %s92, 0
      %s95 = sadd.s32 %s94, 1
      %s96 = scalar_select %p93, %s94, %s95
      %p99 = pneg %p93
      %p100 = scmp.eq.s32.totalorder %s14, 1
      %p101 = por %p99, %p100
      %p102 = scmp.ne.s32.totalorder %s94, %s97
      %p103 = scmp.eq.s32.totalorder %s14, 0
      %p104 = por %p102, %p103
      %p105 = scmp.ne.s32.totalorder %s94, %s97
      %p106 = scmp.eq.s32.totalorder %s19, 1
      %p107 = por %p105, %p106
      %p108 = scmp.ne.s32.totalorder %s97, %s98
      %p109 = scmp.eq.s32.totalorder %s19, 0
      %p110 = por %p108, %p109
      %p111 = scmp.ne.s32.totalorder %s97, %s98
      %p112 = scmp.eq.s32.totalorder %s20, 1
      %p113 = por %p111, %p112
      %p115 = scmp.ne.s32.totalorder %s98, %s114
      %p116 = scmp.eq.s32.totalorder %s20, 0
      %p117 = por %p115, %p116
      %p118 = scmp.le.s32.totalorder 1, %s14
      %p119 = scmp.lt.s32.totalorder %s14, 3
      %p120 = pnand %p118, %p119
      %p121 = pneg %p120
      // Predicated region
      $region9: #{tpu_custom_call.1} parent=5 // pred_check
        _
      $region10: #{tpu_custom_call.1} parent=5 // pred_check_branch
        %123 = sbr.rel (%p120) target = $region12
      $region11: #{tpu_custom_call.1} parent=5 // pred_region
        %s124 = ssub.s32 %s14, 1
      $region12: #{tpu_custom_call.1} parent=5 // pred_fallthru
        _
      %p125 = scmp.lt.s32.totalorder %s14, 2
      // Predicated region
      $region13: #{tpu_custom_call.1} parent=5 // pred_check
        %p126 = pneg %p125
      $region14: #{tpu_custom_call.1} parent=5 // pred_check_branch
        %128 = sbr.rel (%p126) target = $region16
      $region15: #{tpu_custom_call.1} parent=5 // pred_region
        // Predicated region
        $region17: #{tpu_custom_call.1} parent=15 // pred_check
          %p129 = pneg %p48
        $region18: #{tpu_custom_call.1} parent=15 // pred_check_branch
          %131 = sbr.rel (%p129) target = $region20
        $region19: #{tpu_custom_call.1} parent=15 // pred_region
          %s132 = sand.u32 %s38, 1
          %s133 = scalar_lea.sflag [#allocation3], %s132
          %s134 = sand.u32 %s38, 1
          %s135 = smul.addr %s134, 8
          %s136 = scalar_lea.vmem [#allocation2], %s135
          %s138 = ssub.s32 128, 128
          %139 = vsyncadd %s133, %s138
          %s140 = smul.addr %s21, 4
          %s141 = sadd.s32 %s22, %s140
          %s142 = smul.addr %s141, 32
          %s143 = scalar_lea.hbm %s0, %s142
          %s144 = sshll.u32 %s136, 4
          %s145 = int_to_ptr.vmem [resolvable:$true] %s144
          %150 = dma.hbm_to_vmem [thread:$0]  %s143, 128, %s145, %s133, 32, 32, 2
        $region20: #{tpu_custom_call.1} parent=15 // pred_fallthru
          _
        // Predicated region
        $region21: #{tpu_custom_call.1} parent=15 // pred_check
          %p151 = pneg %p76
        $region22: #{tpu_custom_call.1} parent=15 // pred_check_branch
          %153 = sbr.rel (%p151) target = $region24
        $region23: #{tpu_custom_call.1} parent=15 // pred_region
          %s154 = sand.u32 %s66, 1
          %s155 = scalar_lea.sflag [#allocation5], %s154
          %s156 = sand.u32 %s66, 1
          %s157 = smul.addr %s156, 8
          %s158 = scalar_lea.vmem [#allocation4], %s157
          %s160 = ssub.s32 128, 128
          %161 = vsyncadd %s155, %s160
          %s162 = smul.addr %s21, 4
          %s163 = sadd.s32 %s22, %s162
          %s164 = smul.addr %s163, 32
          %s165 = scalar_lea.hbm %s1, %s164
          %s166 = sshll.u32 %s158, 4
          %s167 = int_to_ptr.vmem [resolvable:$true] %s166
          %172 = dma.hbm_to_vmem [thread:$0]  %s165, 128, %s167, %s155, 32, 32, 2
        $region24: #{tpu_custom_call.1} parent=15 // pred_fallthru
          _
      $region16: #{tpu_custom_call.1} parent=5 // pred_fallthru
        _
      %p173 = scmp.le.s32.totalorder 1, %s14
      %p174 = scmp.lt.s32.totalorder %s14, 3
      %p175 = pnand %p173, %p174
      %p176 = pneg %p175
      // Predicated region
      $region25: #{tpu_custom_call.1} parent=5 // pred_check
        _
      $region26: #{tpu_custom_call.1} parent=5 // pred_check_branch
        %178 = sbr.rel (%p175) target = $region28
      $region27: #{tpu_custom_call.1} parent=5 // pred_region
        %s179 = ssub.s32 %s14, 1
        %s180 = sand.u32 %s41, 1
        %s181 = scalar_lea.sflag [#allocation3], %s180
        %s182 = sand.u32 %s41, 1
        %s183 = smul.addr %s182, 8
        %s184 = scalar_lea.vmem [#allocation2], %s183
        // Predicated region
        $region29: #{tpu_custom_call.1} parent=27 // pred_check
          %p185 = pneg %p54
        $region30: #{tpu_custom_call.1} parent=27 // pred_check_branch
          %187 = sbr.rel (%p185) target = $region32
        $region31: #{tpu_custom_call.1} parent=27 // pred_region
          %188 = dma.done %s181, 128
        $region32: #{tpu_custom_call.1} parent=27 // pred_fallthru
          _
        %s189 = sand.u32 %s69, 1
        %s190 = scalar_lea.sflag [#allocation5], %s189
        %s191 = sand.u32 %s69, 1
        %s192 = smul.addr %s191, 8
        %s193 = scalar_lea.vmem [#allocation4], %s192
        // Predicated region
        $region33: #{tpu_custom_call.1} parent=27 // pred_check
          %p194 = pneg %p82
        $region34: #{tpu_custom_call.1} parent=27 // pred_check_branch
          %196 = sbr.rel (%p194) target = $region36
        $region35: #{tpu_custom_call.1} parent=27 // pred_region
          %197 = dma.done %s190, 128
        $region36: #{tpu_custom_call.1} parent=27 // pred_fallthru
          _
        %s198 = sand.u32 %s41, 1
        %s199 = scalar_lea.sflag [#allocation3], %s198
        %s200 = sand.u32 %s41, 1
        %s201 = smul.addr %s200, 8
        %s202 = scalar_lea.vmem [#allocation2], %s201
        %p203 = pneg %p54
        %p204 = pneg %p51
        %s205 = sand.u32 %s69, 1
        %s206 = scalar_lea.sflag [#allocation5], %s205
        %s207 = sand.u32 %s69, 1
        %s208 = smul.addr %s207, 8
        %s209 = scalar_lea.vmem [#allocation4], %s208
        %p210 = pneg %p82
        %p211 = pneg %p79
        %p212 = pneg %p110
        %p213 = pneg %p107
        %p214 = scmp.lt.s32.totalorder %s23, 1
        %s215 = scalar_select %p214, %s23, 1
        %p216 = scmp.lt.s32.totalorder %s24, 0
        %s217 = scalar_select %p216, %s24, 0
        %s218 = sadd.s32 %s217, %s215
        %s219 = scalar_lea.vmem %s2, %s218
        %p220 = scmp.lt.s32.totalorder %s23, 1
        %s221 = scalar_select %p220, %s23, 1
        %p222 = scmp.lt.s32.totalorder %s24, 0
        %s223 = scalar_select %p222, %s24, 0
        %s224 = sadd.s32 %s223, %s221
        %s225 = scalar_lea.vmem %s2, %s224
        %v226 = vld [vmem:[%s184] sm:$0x3]
        %v227 = vld [vmem:[%s184 + $0x2] sm:$0x3]
        %v228 = vld [vmem:[%s184 + $0x4] sm:$0x3]
        %v229 = vld [vmem:[%s184 + $0x6] sm:$0x3]
        %v230 = vmul.f32 %v226, 0.1
        %v231 = vmul.f32 %v227, 0.1
        %v232 = vmul.f32 %v228, 0.1
        %v233 = vmul.f32 %v229, 0.1
        %v234 = vld [vmem:[%s193] sm:$0x3]
        %v235 = vld [vmem:[%s193 + $0x2] sm:$0x3]
        %v236 = vld [vmem:[%s193 + $0x4] sm:$0x3]
        %v237 = vld [vmem:[%s193 + $0x6] sm:$0x3]
        %v238 = vmul.f32 %v234, 0.1
        %v239 = vmul.f32 %v235, 0.1
        %v240 = vmul.f32 %v236, 0.1
        %v241 = vmul.f32 %v237, 0.1
        %vm242 = vcmask 1041408
        %v243 = vsel %vm242, %v230, -inf
        %v244 = vsel %vm242, %v231, -inf
        %v245 = vsel %vm242, %v232, -inf
        %v246 = vsel %vm242, %v233, -inf
        %v247 = vmax.f32 %v243, %v244
        %v248 = vmax.f32 %v245, %v246
        %v249 = vmax.f32 %v247, %v248
        %v250 = vsub.f32 %v230, %v249
        %v251 = vsub.f32 %v231, %v249
        %v252 = vsub.f32 %v232, %v249
        %v253 = vsub.f32 %v233, %v249
        %v254 = vmul.f32 %v250, 1.442695
        %v255 = vpow.pop %v254
        %v256 = vmul.f32 %v251, 1.442695
        %v257 = vpow.pop %v256
        %v258 = vmul.f32 %v252, 1.442695
        %v259 = vpow.pop %v258
        %v260 = vmul.f32 %v253, 1.442695
        %v261 = vpow.pop %v260
        %v262 = vsel %vm242, %v255, 0.0
        %v263 = vsel %vm242, %v257, 0.0
        %v264 = vadd.f32 %v262, %v263
        %v265 = vsel %vm242, %v259, 0.0
        %v266 = vadd.f32 %v264, %v265
        %v267 = vsel %vm242, %v261, 0.0
        %v268 = vadd.f32 %v266, %v267
        %v269 = vlog2.pop %v268
        %v270 = vmul.f32 %v269, 0.6931472
        %v271 = vsel %vm242, %v238, -inf
        %v272 = vsel %vm242, %v239, -inf
        %v273 = vsel %vm242, %v240, -inf
        %v274 = vsel %vm242, %v241, -inf
        %v275 = vmax.f32 %v271, %v272
        %v276 = vmax.f32 %v273, %v274
        %v277 = vmax.f32 %v275, %v276
        %v278 = vsub.f32 %v238, %v277
        %v279 = vsub.f32 %v239, %v277
        %v280 = vsub.f32 %v240, %v277
        %v281 = vsub.f32 %v241, %v277
        %v282 = vmul.f32 %v278, 1.442695
        %v283 = vpow.pop %v282
        %v284 = vmul.f32 %v279, 1.442695
        %v285 = vpow.pop %v284
        %v286 = vmul.f32 %v280, 1.442695
        %v287 = vpow.pop %v286
        %v288 = vmul.f32 %v281, 1.442695
        %v289 = vpow.pop %v288
        %v290 = vsel %vm242, %v283, 0.0
        %v291 = vsel %vm242, %v285, 0.0
        %v292 = vadd.f32 %v290, %v291
        %v293 = vsel %vm242, %v287, 0.0
        %v294 = vadd.f32 %v292, %v293
        %v295 = vsel %vm242, %v289, 0.0
        %v296 = vadd.f32 %v294, %v295
        %v297 = vlog2.pop %v296
        %v298 = vmul.f32 %v297, 0.6931472
        %v299 = vsub.f32 %v270, %v298
        %v300 = vsub.f32 %v278, %v250
        %v301 = vsub.f32 %v279, %v251
        %v302 = vsub.f32 %v280, %v252
        %v303 = vsub.f32 %v281, %v253
        %v304 = vadd.f32 %v300, %v299
        %v305 = vadd.f32 %v301, %v299
        %v306 = vadd.f32 %v302, %v299
        %v307 = vadd.f32 %v303, %v299
        %v308 = vmul.f32 %v283, %v304
        %v309 = vmul.f32 %v285, %v305
        %v310 = vmul.f32 %v287, %v306
        %v311 = vmul.f32 %v289, %v307
        %v312 = vsel %vm242, %v308, 0.0
        %v313 = vsel %vm242, %v309, 0.0
        %v314 = vadd.f32 %v312, %v313
        %v315 = vsel %vm242, %v310, 0.0
        %v316 = vadd.f32 %v314, %v315
        %v317 = vsel %vm242, %v311, 0.0
        %v318 = vadd.f32 %v316, %v317
        %v319 = vrcp.pop %v296
        %v320 = vmul.f32 %v318, %v319
        %v321 = vsel %vm242, %v320, 0.0
        %322 = vadd.xlane.f32.xlu0 %v321
        %v323 = vpop.xlane.xlu0 %322
        %v324 = vrot.slane %v323, 4
        %v325 = vadd.f32 %v323, %v324
        %v326 = vrot.slane %v325, 2
        %v327 = vadd.f32 %v325, %v326
        %v328 = vrot.slane %v327, 1
        %v329 = vadd.f32 %v327, %v328
        %s330 = vtos %v329
        %v331 = vstv %s330
        %vm332 = vcmask 0
        %333 = vst.msk [vmem:[%s225] sm:$0x1] %vm332, %v331
        %p334 = scmp.lt.s32.totalorder %s23, 1
        %s335 = scalar_select %p334, %s23, 1
        %p336 = scmp.lt.s32.totalorder %s24, 0
        %s337 = scalar_select %p336, %s24, 0
        %s338 = sadd.s32 %s337, %s335
        %s339 = scalar_lea.vmem %s2, %s338
        // Predicated region
        $region37: #{tpu_custom_call.1} parent=27 // pred_check
          %p340 = pneg %p107
        $region38: #{tpu_custom_call.1} parent=27 // pred_check_branch
          %342 = sbr.rel (%p340) target = $region40
        $region39: #{tpu_custom_call.1} parent=27 // pred_region
          _
        $region40: #{tpu_custom_call.1} parent=27 // pred_fallthru
          _
      $region28: #{tpu_custom_call.1} parent=5 // pred_fallthru
        _
      %p343 = scmp.le.s32.totalorder 2, %s14
      // Predicated region
      $region41: #{tpu_custom_call.1} parent=5 // pred_check
        %p344 = pneg %p343
      $region42: #{tpu_custom_call.1} parent=5 // pred_check_branch
        %346 = sbr.rel (%p344) target = $region44
      $region43: #{tpu_custom_call.1} parent=5 // pred_region
        %s347 = ssub.s32 %s14, 2
        // Predicated region
        $region45: #{tpu_custom_call.1} parent=43 // pred_check
          %p348 = pneg %p113
        $region46: #{tpu_custom_call.1} parent=43 // pred_check_branch
          %350 = sbr.rel (%p348) target = $region48
        $region47: #{tpu_custom_call.1} parent=43 // pred_region
          %p351 = scmp.lt.s32.totalorder %s25, 1
          %s352 = scalar_select %p351, %s25, 1
          %p353 = scmp.lt.s32.totalorder %s26, 0
          %s354 = scalar_select %p353, %s26, 0
          %s355 = sadd.s32 %s354, %s352
          %s356 = scalar_lea.vmem %s2, %s355
        $region48: #{tpu_custom_call.1} parent=43 // pred_fallthru
          _
      $region44: #{tpu_custom_call.1} parent=5 // pred_fallthru
        _
    $region6: #{tpu_custom_call.1} parent=1 // loop_footer
      %s18 = sadd.s32 1, %s14
    $region7: #{tpu_custom_call.1} parent=1 // loop_footer_branch
      %13 = sbr.rel target = $region3
    $region8: #{tpu_custom_call.1} parent=1 // loop_exit
      _
    %357 = vsyncpa [#allocation3], 1
    %s358 = scalar_lea.sflag [#allocation3], 1
    %359 = vsyncpa %s358, 1
    %360 = vsyncpa [#allocation5], 1
    %s361 = scalar_lea.sflag [#allocation5], 1
    %362 = vsyncpa %s361, 1

</llo_original>
